<compile_context>
chip_gen: v6e
topology: v6e:2x2x1
jax: 0.10.0
libtpu: 0.0.40
codegen_flags: <defaults>
</compile_context>

<pallas_src>
import functools

import jax
import jax.numpy as jnp
from jax import lax
from jax.experimental import pallas as pl
from jax.experimental.pallas import tpu as pltpu


def _round_up(x, m):
    return (x + m - 1) // m * m


def bert_output_kernel(x_ref, w_ref, b_ref, res_ref, gamma_ref, beta_ref, o_ref,
                       *, eps, inv_n):
    # dense: (tm, K) @ (K, N) -> (tm, N); bf16 operands, f32 accumulation on MXU.
    h = jnp.dot(x_ref[...], w_ref[...], preferred_element_type=jnp.float32)
    h = h + b_ref[...].astype(jnp.float32)
    # TODO(synk): dropout is identity (eval mode); training-mode RNG dropout not implemented.
    # residual add (kept in f32 for the LayerNorm)
    h = h + res_ref[...].astype(jnp.float32)
    # LayerNorm over last dim (biased variance, like torch.nn.LayerNorm).
    # 1/N hoisted to a single multiply; rsqrt goes to the EUP slot.
    mean = jnp.sum(h, axis=-1, keepdims=True) * inv_n
    centered = h - mean
    var = jnp.sum(centered * centered, axis=-1, keepdims=True) * inv_n
    inv_std = lax.rsqrt(var + eps)
    out = centered * inv_std * gamma_ref[...].astype(jnp.float32) \
        + beta_ref[...].astype(jnp.float32)
    o_ref[...] = out.astype(o_ref.dtype)


def bert_output(hidden_states, input_tensor, w, b, gamma, beta, *,
                eps=1e-12, tm=512, compute_dtype=jnp.bfloat16):
    """Fused BertOutput forward (eval mode).

    hidden_states: [B, S, K]; input_tensor: [B, S, N]; w: [K, N];
    b, gamma, beta: [N].  compute_dtype: dtype for the matmul operands
    (bf16 recommended; pass None to keep the input dtype).
    """
    B, S, K = hidden_states.shape
    N = input_tensor.shape[-1]
    M = B * S
    out_dtype = input_tensor.dtype

    # Effective row tile: multiple of 128 (MXU-/bf16-sublane-friendly), no larger
    # than needed for tiny problems.  Rows are zero-padded up to a tile multiple
    # (padded rows are computed and then sliced away; LN of the padded rows is
    # finite, never NaN).
    tm_eff = max(128, min(tm, _round_up(M, 128)))
    M_pad = _round_up(M, tm_eff)

    x2 = hidden_states.reshape(M, K)
    r2 = input_tensor.reshape(M, N)
    if compute_dtype is not None:
        x2 = x2.astype(compute_dtype)
        wc = w.astype(compute_dtype)
    else:
        wc = w
    if M_pad != M:
        x2 = jnp.pad(x2, ((0, M_pad - M), (0, 0)))
        r2 = jnp.pad(r2, ((0, M_pad - M), (0, 0)))

    b2 = b.reshape(1, N).astype(jnp.float32)
    g2 = gamma.reshape(1, N).astype(jnp.float32)
    be2 = beta.reshape(1, N).astype(jnp.float32)

    itm = lambda dt: jnp.dtype(dt).itemsize

    # VMEM budget: double-buffered activation/residual/output tiles + the
    # resident [K, N] weight (also double-buffered by BlockSpec, though its
    # constant index_map means it is only DMA'd once) + small params + margin.
    vmem_needed = (2 * tm_eff * K * itm(x2.dtype)
                   + 2 * K * N * itm(wc.dtype)
                   + 2 * tm_eff * N * itm(r2.dtype)
                   + 2 * tm_eff * N * itm(out_dtype)
                   + 6 * N * 4
                   + (2 << 20))
    vmem_limit = int(min(100 * (1 << 20), max(32 * (1 << 20), 5 * vmem_needed // 4)))

    cost = pl.CostEstimate(
        flops=2 * M_pad * K * N,
        transcendentals=M_pad,  # one rsqrt per row
        bytes_accessed=(M_pad * K * itm(x2.dtype)
                        + K * N * itm(wc.dtype)
                        + M_pad * N * itm(r2.dtype)
                        + M_pad * N * itm(out_dtype)
                        + 3 * N * 4),
    )

    kernel = functools.partial(bert_output_kernel, eps=eps, inv_n=1.0 / N)

    out = pl.pallas_call(
        kernel,
        out_shape=jax.ShapeDtypeStruct((M_pad, N), out_dtype),
        grid_spec=pltpu.PrefetchScalarGridSpec(
            num_scalar_prefetch=0,
            grid=(M_pad // tm_eff,),
            in_specs=[
                pl.BlockSpec((tm_eff, K), lambda i: (i, 0)),  # activation tile (bf16)
                pl.BlockSpec((K, N), lambda i: (0, 0)),       # dense weight, resident
                pl.BlockSpec((1, N), lambda i: (0, 0)),       # dense bias
                pl.BlockSpec((tm_eff, N), lambda i: (i, 0)),  # residual tile
                pl.BlockSpec((1, N), lambda i: (0, 0)),       # LN gamma
                pl.BlockSpec((1, N), lambda i: (0, 0)),       # LN beta
            ],
            out_specs=pl.BlockSpec((tm_eff, N), lambda i: (i, 0)),  # lane-dense output
        ),
        compiler_params=pltpu.CompilerParams(
            dimension_semantics=("parallel",),      # shards M across v7x's 2 TCs
            vmem_limit_bytes=vmem_limit,
        ),
        cost_estimate=cost,
    )(x2, wc, b2, r2, g2, be2)

    return out[:M].reshape(B, S, N)


def bert_output_ref(hidden_states, input_tensor, w, b, gamma, beta, eps=1e-12,
                    compute_dtype=None):
    x = hidden_states if compute_dtype is None else hidden_states.astype(compute_dtype)
    wc = w if compute_dtype is None else w.astype(compute_dtype)
    h = jnp.einsum("bsk,kn->bsn", x, wc,
                   preferred_element_type=jnp.float32) + b
    h = h + input_tensor
    mean = jnp.mean(h, axis=-1, keepdims=True)
    var = jnp.mean((h - mean) ** 2, axis=-1, keepdims=True)
    out = (h - mean) * lax.rsqrt(var + eps) * gamma + beta
    return out.astype(input_tensor.dtype)


if __name__ == "__main__":
    # Small config: batch=2, seq=8, hidden_size=128, intermediate_size=512
    B, S, HIDDEN, INTER = 2, 8, 128, 512
    EPS = 1e-12

    key = jax.random.PRNGKey(0)
    k1, k2, k3, k4, k5, k6 = jax.random.split(key, 6)

    hidden_states = jax.random.normal(k1, (B, S, INTER), dtype=jnp.float32)
    input_tensor = jax.random.normal(k2, (B, S, HIDDEN), dtype=jnp.float32)

    # Deterministic parameter init (synthetic, not a checkpoint load)
    w = jax.random.normal(k3, (INTER, HIDDEN), dtype=jnp.float32) * 0.02
    b = jax.random.normal(k4, (HIDDEN,), dtype=jnp.float32) * 0.02
    gamma = jnp.ones((HIDDEN,), dtype=jnp.float32) + \
        jax.random.normal(k5, (HIDDEN,), dtype=jnp.float32) * 0.01
    beta = jax.random.normal(k6, (HIDDEN,), dtype=jnp.float32) * 0.01

    out = bert_output(hidden_states, input_tensor, w, b, gamma, beta, eps=EPS)
    out = jax.block_until_ready(out)
    assert out.shape == (B, S, HIDDEN)

    # Tight check vs. a reference that mirrors the bf16 matmul operands.
    ref_bf16 = bert_output_ref(hidden_states, input_tensor, w, b, gamma, beta,
                               eps=EPS, compute_dtype=jnp.bfloat16)
    assert jnp.allclose(out, ref_bf16, atol=5e-3, rtol=5e-3), \
        f"max abs err (bf16 ref) {jnp.max(jnp.abs(out - ref_bf16))}"

    # Looser sanity check vs. the pure-f32 reference.
    ref_f32 = bert_output_ref(hidden_states, input_tensor, w, b, gamma, beta, eps=EPS)
    assert jnp.allclose(out, ref_f32, atol=3e-2, rtol=3e-2), \
        f"max abs err (f32 ref) {jnp.max(jnp.abs(out - ref_f32))}"

    print("KERNEL_OK")
</pallas_src>

<mosaic_0001>
module attributes {stable_mosaic.version = 11 : i64} {
  func.func @bert_output_kernel(%arg0: i32, %arg1: memref<128x512xbf16, #tpu.memory_space<vmem>>, %arg2: memref<512x128xbf16, #tpu.memory_space<vmem>>, %arg3: memref<1x128xf32, #tpu.memory_space<vmem>>, %arg4: memref<128x128xf32, #tpu.memory_space<vmem>>, %arg5: memref<1x128xf32, #tpu.memory_space<vmem>>, %arg6: memref<1x128xf32, #tpu.memory_space<vmem>>, %arg7: memref<128x128xf32, #tpu.memory_space<vmem>>) attributes {dimension_semantics = [#tpu.dimension_semantics<parallel>], iteration_bounds = array<i64: 1>, scalar_prefetch = 0 : i64, scratch_operands = 0 : i64, tpu.core_type = #tpu.core_type<tc>, window_params = [{transform_indices = @transform_0, window_bounds = array<i64: 128, 512>}, {pipeline_mode = #tpu.pipeline_mode<synchronous>, transform_indices = @transform_1, window_bounds = array<i64: 512, 128>}, {pipeline_mode = #tpu.pipeline_mode<synchronous>, transform_indices = @transform_2, window_bounds = array<i64: 1, 128>}, {transform_indices = @transform_3, window_bounds = array<i64: 128, 128>}, {pipeline_mode = #tpu.pipeline_mode<synchronous>, transform_indices = @transform_4, window_bounds = array<i64: 1, 128>}, {pipeline_mode = #tpu.pipeline_mode<synchronous>, transform_indices = @transform_5, window_bounds = array<i64: 1, 128>}, {transform_indices = @transform_6, window_bounds = array<i64: 128, 128>}]} {
    %c0 = arith.constant 0 : index
    %c0_0 = arith.constant 0 : index
    %0 = vector.load %arg1[%c0, %c0_0] : memref<128x512xbf16, #tpu.memory_space<vmem>>, vector<128x512xbf16>
    %c0_1 = arith.constant 0 : index
    %c0_2 = arith.constant 0 : index
    %1 = vector.load %arg2[%c0_1, %c0_2] : memref<512x128xbf16, #tpu.memory_space<vmem>>, vector<512x128xbf16>
    %cst = arith.constant dense<0.000000e+00> : vector<128x128xf32>
    %2 = tpu.matmul %0, %1, %cst {dimension_numbers = #tpu.dot_dimension_numbers<[1], [0], [0], [1], [0, 0, 1, 1], [], []>} : vector<128x512xbf16>, vector<512x128xbf16>, vector<128x128xf32> -> vector<128x128xf32>
    %c0_3 = arith.constant 0 : index
    %c0_4 = arith.constant 0 : index
    %3 = vector.load %arg3[%c0_3, %c0_4] : memref<1x128xf32, #tpu.memory_space<vmem>>, vector<1x128xf32>
    %4 = vector.broadcast %3 : vector<1x128xf32> to vector<128x128xf32>
    %5 = arith.addf %2, %4 : vector<128x128xf32>
    %c0_5 = arith.constant 0 : index
    %c0_6 = arith.constant 0 : index
    %6 = vector.load %arg4[%c0_5, %c0_6] : memref<128x128xf32, #tpu.memory_space<vmem>>, vector<128x128xf32>
    %7 = arith.addf %5, %6 : vector<128x128xf32>
    %cst_7 = arith.constant dense<0.000000e+00> : vector<128xf32>
    %8 = vector.multi_reduction <add>, %7, %cst_7 [1] : vector<128x128xf32> to vector<128xf32>
    %9 = vector.shape_cast %8 : vector<128xf32> to vector<128x1xf32>
    %cst_8 = arith.constant 7.812500e-03 : f32
    %10 = vector.broadcast %cst_8 : f32 to vector<128x1xf32>
    %11 = arith.mulf %9, %10 : vector<128x1xf32>
    %12 = vector.broadcast %11 : vector<128x1xf32> to vector<128x128xf32>
    %13 = arith.subf %7, %12 : vector<128x128xf32>
    %14 = arith.mulf %13, %13 : vector<128x128xf32>
    %cst_9 = arith.constant dense<0.000000e+00> : vector<128xf32>
    %15 = vector.multi_reduction <add>, %14, %cst_9 [1] : vector<128x128xf32> to vector<128xf32>
    %16 = vector.shape_cast %15 : vector<128xf32> to vector<128x1xf32>
    %cst_10 = arith.constant 7.812500e-03 : f32
    %17 = vector.broadcast %cst_10 : f32 to vector<128x1xf32>
    %18 = arith.mulf %16, %17 : vector<128x1xf32>
    %cst_11 = arith.constant 9.99999996E-13 : f32
    %19 = vector.broadcast %cst_11 : f32 to vector<128x1xf32>
    %20 = arith.addf %18, %19 : vector<128x1xf32>
    %21 = math.rsqrt %20 : vector<128x1xf32>
    %22 = vector.broadcast %21 : vector<128x1xf32> to vector<128x128xf32>
    %23 = arith.mulf %13, %22 : vector<128x128xf32>
    %c0_12 = arith.constant 0 : index
    %c0_13 = arith.constant 0 : index
    %24 = vector.load %arg5[%c0_12, %c0_13] : memref<1x128xf32, #tpu.memory_space<vmem>>, vector<1x128xf32>
    %25 = vector.broadcast %24 : vector<1x128xf32> to vector<128x128xf32>
    %26 = arith.mulf %23, %25 : vector<128x128xf32>
    %c0_14 = arith.constant 0 : index
    %c0_15 = arith.constant 0 : index
    %27 = vector.load %arg6[%c0_14, %c0_15] : memref<1x128xf32, #tpu.memory_space<vmem>>, vector<1x128xf32>
    %28 = vector.broadcast %27 : vector<1x128xf32> to vector<128x128xf32>
    %29 = arith.addf %26, %28 : vector<128x128xf32>
    %c0_16 = arith.constant 0 : index
    %c0_17 = arith.constant 0 : index
    %30 = vector.load %arg7[%c0_16, %c0_17] : memref<128x128xf32, #tpu.memory_space<vmem>>, vector<128x128xf32>
    tpu.vector_store %arg7[%c0_16, %c0_17], %29 {strides = array<i32>} : memref<128x128xf32, #tpu.memory_space<vmem>>, vector<128x128xf32>,
    return
  }
  func.func @transform_0(%arg0: i32) -> (i32, i32) {
    %c0_i32 = arith.constant 0 : i32
    %c0_i32_0 = arith.constant 0 : i32
    return %arg0, %c0_i32 : i32, i32
  }
  func.func @transform_1(%arg0: i32) -> (i32, i32) {
    %c0_i32 = arith.constant 0 : i32
    %c0_i32_0 = arith.constant 0 : i32
    %c0_i32_1 = arith.constant 0 : i32
    return %c0_i32, %c0_i32_0 : i32, i32
  }
  func.func @transform_2(%arg0: i32) -> (i32, i32) {
    %c0_i32 = arith.constant 0 : i32
    %c0_i32_0 = arith.constant 0 : i32
    %c0_i32_1 = arith.constant 0 : i32
    return %c0_i32, %c0_i32_0 : i32, i32
  }
  func.func @transform_3(%arg0: i32) -> (i32, i32) {
    %c0_i32 = arith.constant 0 : i32
    %c0_i32_0 = arith.constant 0 : i32
    return %arg0, %c0_i32 : i32, i32
  }
  func.func @transform_4(%arg0: i32) -> (i32, i32) {
    %c0_i32 = arith.constant 0 : i32
    %c0_i32_0 = arith.constant 0 : i32
    %c0_i32_1 = arith.constant 0 : i32
    return %c0_i32, %c0_i32_0 : i32, i32
  }
  func.func @transform_5(%arg0: i32) -> (i32, i32) {
    %c0_i32 = arith.constant 0 : i32
    %c0_i32_0 = arith.constant 0 : i32
    %c0_i32_1 = arith.constant 0 : i32
    return %c0_i32, %c0_i32_0 : i32, i32
  }
  func.func @transform_6(%arg0: i32) -> (i32, i32) {
    %c0_i32 = arith.constant 0 : i32
    %c0_i32_0 = arith.constant 0 : i32
    return %arg0, %c0_i32 : i32, i32
  }
}

</mosaic_0001>

<llo_original>
// kernel: tpu_custom_call.1
$region0: #{tpu_custom_call.1}
  #allocation0 [shape = 'u32[]', space=smem, size = 0x4, offset = 0x4, fixed_abs, tag = 'smem constant byte address 0x4 - core index']
  #allocation1 [shape = 'u32[144,128]{1,0:T(1,128)}', space=vmem, size = 0x12000, scoped, tag = 'internal scratch']
  %s0 = inlined_call_operand.hbm [shape: bf16[128,512], index: 0, kind: input, shape index: {}]
  %s1 = inlined_call_operand.hbm [shape: bf16[512,128], index: 1, kind: input, shape index: {}]
  %s2 = inlined_call_operand.vmem [shape: f32[1,128], index: 2, kind: input, shape index: {}]
  %s3 = inlined_call_operand.hbm [shape: f32[128,128], index: 3, kind: input, shape index: {}]
  %s4 = inlined_call_operand.vmem [shape: f32[1,128], index: 4, kind: input, shape index: {}]
  %s5 = inlined_call_operand.vmem [shape: f32[1,128], index: 5, kind: input, shape index: {}]
  %s6 = inlined_call_operand.hbm [shape: f32[128,128], index: 6, kind: output, shape index: {}]
  %s7 = sld [smem:[#allocation0]]
  $region46: #{tpu_custom_call.1} parent=0
    _
  %s9 = ssub.s32 1, %s7
  %s10 = scalar_select 0, %s9, %s7
  $region1: #{tpu_custom_call.1} parent=0
    #allocation2 [shape = 'u8[131072]{0}', space=vmem, size = 0x20000, scoped, tag = 'input window, operand 0, single buffered']
    #allocation3 [shape = 's32[1]{0}', space=sflag, size = 0x4, scoped, tag = 'scoped memory for tpu_custom_call.1']
    #allocation4 [shape = 's32[1]{0}', space=sflag, size = 0x4, scoped, tag = 'scoped memory for tpu_custom_call.1']
    #allocation5 [shape = 'u8[131072]{0}', space=vmem, size = 0x20000, scoped, tag = 'input window, operand 1, single buffered']
    #allocation6 [shape = 's32[1]{0}', space=sflag, size = 0x4, scoped, tag = 'scoped memory for tpu_custom_call.1']
    #allocation7 [shape = 'u8[65536]{0}', space=vmem, size = 0x10000, scoped, tag = 'input window, operand 3, single buffered']
    #allocation8 [shape = 'u8[65536]{0}', space=vmem, size = 0x10000, scoped, tag = 'output window, operand 0, single buffered']
    %11 = vsyncpa [#allocation3], 0
    %12 = vsyncpa [#allocation6], 0
    %13 = vsyncpa [#allocation4], 0
    // Predicated region
    $region2: #{tpu_custom_call.1} parent=1 // pred_check
      _
    $region3: #{tpu_custom_call.1} parent=1 // pred_check_branch
      %15 = sbr.rel (0) target = $region5
    $region4: #{tpu_custom_call.1} parent=1 // pred_region
      %s17 = ssub.s32 4096, 4096
      %18 = vsyncadd [#allocation3], %s17
      %s19 = sshll.u32 [#allocation2], 4
      %s20 = int_to_ptr.vmem [resolvable:$true] %s19
      %25 = dma.hbm_to_vmem [thread:$0]  %s0, 4096, %s20, [#allocation3], 256, 256, 16
    $region5: #{tpu_custom_call.1} parent=1 // pred_fallthru
      _
    // Predicated region
    $region6: #{tpu_custom_call.1} parent=1 // pred_check
      _
    $region7: #{tpu_custom_call.1} parent=1 // pred_check_branch
      %27 = sbr.rel (0) target = $region9
    $region8: #{tpu_custom_call.1} parent=1 // pred_region
      %s29 = ssub.s32 4096, 4096
      %30 = vsyncadd [#allocation6], %s29
      %s31 = sshll.u32 [#allocation5], 4
      %s32 = int_to_ptr.vmem [resolvable:$true] %s31
      %37 = dma.hbm_to_vmem [thread:$0]  %s1, 4096, %s32, [#allocation6], 64, 64, 4
    $region9: #{tpu_custom_call.1} parent=1 // pred_fallthru
      _
    // Predicated region
    $region10: #{tpu_custom_call.1} parent=1 // pred_check
      _
    $region11: #{tpu_custom_call.1} parent=1 // pred_check_branch
      %39 = sbr.rel (0) target = $region13
    $region12: #{tpu_custom_call.1} parent=1 // pred_region
      _
    $region13: #{tpu_custom_call.1} parent=1 // pred_fallthru
      _
    // Predicated region
    $region14: #{tpu_custom_call.1} parent=1 // pred_check
      _
    $region15: #{tpu_custom_call.1} parent=1 // pred_check_branch
      %41 = sbr.rel (0) target = $region17
    $region16: #{tpu_custom_call.1} parent=1 // pred_region
      %s43 = ssub.s32 2048, 2048
      %44 = vsyncadd [#allocation6], %s43
      %s45 = sshll.u32 [#allocation7], 4
      %s46 = int_to_ptr.vmem [resolvable:$true] %s45
      %51 = dma.hbm_to_vmem [thread:$0]  %s3, 2048, %s46, [#allocation6], 128, 128, 8
    $region17: #{tpu_custom_call.1} parent=1 // pred_fallthru
      _
    // Predicated region
    $region18: #{tpu_custom_call.1} parent=1 // pred_check
      _
    $region19: #{tpu_custom_call.1} parent=1 // pred_check_branch
      %53 = sbr.rel (0) target = $region21
    $region20: #{tpu_custom_call.1} parent=1 // pred_region
      _
    $region21: #{tpu_custom_call.1} parent=1 // pred_fallthru
      _
    // Predicated region
    $region22: #{tpu_custom_call.1} parent=1 // pred_check
      _
    $region23: #{tpu_custom_call.1} parent=1 // pred_check_branch
      %55 = sbr.rel (0) target = $region25
    $region24: #{tpu_custom_call.1} parent=1 // pred_region
      _
    $region25: #{tpu_custom_call.1} parent=1 // pred_fallthru
      _
    // Predicated region
    $region26: #{tpu_custom_call.1} parent=1 // pred_check
      _
    $region27: #{tpu_custom_call.1} parent=1 // pred_check_branch
      %57 = sbr.rel (0) target = $region29
    $region28: #{tpu_custom_call.1} parent=1 // pred_region
      %58 = dma.done [#allocation3], 4096
    $region29: #{tpu_custom_call.1} parent=1 // pred_fallthru
      _
    // Predicated region
    $region30: #{tpu_custom_call.1} parent=1 // pred_check
      _
    $region31: #{tpu_custom_call.1} parent=1 // pred_check_branch
      %60 = sbr.rel (0) target = $region33
    $region32: #{tpu_custom_call.1} parent=1 // pred_region
      %61 = dma.done [#allocation6], 4096
    $region33: #{tpu_custom_call.1} parent=1 // pred_fallthru
      _
    // Predicated region
    $region34: #{tpu_custom_call.1} parent=1 // pred_check
      _
    $region35: #{tpu_custom_call.1} parent=1 // pred_check_branch
      %63 = sbr.rel (0) target = $region37
    $region36: #{tpu_custom_call.1} parent=1 // pred_region
      %64 = dma.done [#allocation6], 2048
    $region37: #{tpu_custom_call.1} parent=1 // pred_fallthru
      _
    %v66 = vld [vmem:[#allocation2] sm:$0xff]
    %v67 = vld [vmem:[#allocation2 + $0x8] sm:$0xff]
    %v68 = vld [vmem:[#allocation2 + $0x10] sm:$0xff]
    %v69 = vld [vmem:[#allocation2 + $0x18] sm:$0xff]
    %v70 = vld [vmem:[#allocation2 + $0x20] sm:$0xff]
    %v71 = vld [vmem:[#allocation2 + $0x28] sm:$0xff]
    %v72 = vld [vmem:[#allocation2 + $0x30] sm:$0xff]
    %v73 = vld [vmem:[#allocation2 + $0x38] sm:$0xff]
    %v74 = vld [vmem:[#allocation2 + $0x40] sm:$0xff]
    %v75 = vld [vmem:[#allocation2 + $0x48] sm:$0xff]
    %v76 = vld [vmem:[#allocation2 + $0x50] sm:$0xff]
    %v77 = vld [vmem:[#allocation2 + $0x58] sm:$0xff]
    %v78 = vld [vmem:[#allocation2 + $0x60] sm:$0xff]
    %v79 = vld [vmem:[#allocation2 + $0x68] sm:$0xff]
    %v80 = vld [vmem:[#allocation2 + $0x70] sm:$0xff]
    %v81 = vld [vmem:[#allocation2 + $0x78] sm:$0xff]
    %v82 = vld [vmem:[#allocation2 + $0x80] sm:$0xff]
    %v83 = vld [vmem:[#allocation2 + $0x88] sm:$0xff]
    %v84 = vld [vmem:[#allocation2 + $0x90] sm:$0xff]
    %v85 = vld [vmem:[#allocation2 + $0x98] sm:$0xff]
    %v86 = vld [vmem:[#allocation2 + $0xa0] sm:$0xff]
    %v87 = vld [vmem:[#allocation2 + $0xa8] sm:$0xff]
    %v88 = vld [vmem:[#allocation2 + $0xb0] sm:$0xff]
    %v89 = vld [vmem:[#allocation2 + $0xb8] sm:$0xff]
    %v90 = vld [vmem:[#allocation2 + $0xc0] sm:$0xff]
    %v91 = vld [vmem:[#allocation2 + $0xc8] sm:$0xff]
    %v92 = vld [vmem:[#allocation2 + $0xd0] sm:$0xff]
    %v93 = vld [vmem:[#allocation2 + $0xd8] sm:$0xff]
    %v94 = vld [vmem:[#allocation2 + $0xe0] sm:$0xff]
    %v95 = vld [vmem:[#allocation2 + $0xe8] sm:$0xff]
    %v96 = vld [vmem:[#allocation2 + $0xf0] sm:$0xff]
    %v97 = vld [vmem:[#allocation2 + $0xf8] sm:$0xff]
    %v98 = vld [vmem:[#allocation5] sm:$0xf]
    %v99 = vld [vmem:[#allocation5 + $0x4] sm:$0xf]
    %v100 = vld [vmem:[#allocation5 + $0x8] sm:$0xf]
    %v101 = vld [vmem:[#allocation5 + $0xc] sm:$0xf]
    %v102 = vld [vmem:[#allocation5 + $0x10] sm:$0xf]
    %v103 = vld [vmem:[#allocation5 + $0x14] sm:$0xf]
    %v104 = vld [vmem:[#allocation5 + $0x18] sm:$0xf]
    %v105 = vld [vmem:[#allocation5 + $0x1c] sm:$0xf]
    %v106 = vld [vmem:[#allocation5 + $0x20] sm:$0xf]
    %v107 = vld [vmem:[#allocation5 + $0x24] sm:$0xf]
    %v108 = vld [vmem:[#allocation5 + $0x28] sm:$0xf]
    %v109 = vld [vmem:[#allocation5 + $0x2c] sm:$0xf]
    %v110 = vld [vmem:[#allocation5 + $0x30] sm:$0xf]
    %v111 = vld [vmem:[#allocation5 + $0x34] sm:$0xf]
    %v112 = vld [vmem:[#allocation5 + $0x38] sm:$0xf]
    %v113 = vld [vmem:[#allocation5 + $0x3c] sm:$0xf]
    %v114 = vld [vmem:[#allocation5 + $0x40] sm:$0xf]
    %v115 = vld [vmem:[#allocation5 + $0x44] sm:$0xf]
    %v116 = vld [vmem:[#allocation5 + $0x48] sm:$0xf]
    %v117 = vld [vmem:[#allocation5 + $0x4c] sm:$0xf]
    %v118 = vld [vmem:[#allocation5 + $0x50] sm:$0xf]
    %v119 = vld [vmem:[#allocation5 + $0x54] sm:$0xf]
    %v120 = vld [vmem:[#allocation5 + $0x58] sm:$0xf]
    %v121 = vld [vmem:[#allocation5 + $0x5c] sm:$0xf]
    %v122 = vld [vmem:[#allocation5 + $0x60] sm:$0xf]
    %v123 = vld [vmem:[#allocation5 + $0x64] sm:$0xf]
    %v124 = vld [vmem:[#allocation5 + $0x68] sm:$0xf]
    %v125 = vld [vmem:[#allocation5 + $0x6c] sm:$0xf]
    %v126 = vld [vmem:[#allocation5 + $0x70] sm:$0xf]
    %v127 = vld [vmem:[#allocation5 + $0x74] sm:$0xf]
    %v128 = vld [vmem:[#allocation5 + $0x78] sm:$0xf]
    %v129 = vld [vmem:[#allocation5 + $0x7c] sm:$0xf]
    %v130 = vld [vmem:[#allocation5 + $0x80] sm:$0xf]
    %v131 = vld [vmem:[#allocation5 + $0x84] sm:$0xf]
    %v132 = vld [vmem:[#allocation5 + $0x88] sm:$0xf]
    %v133 = vld [vmem:[#allocation5 + $0x8c] sm:$0xf]
    %v134 = vld [vmem:[#allocation5 + $0x90] sm:$0xf]
    %v135 = vld [vmem:[#allocation5 + $0x94] sm:$0xf]
    %v136 = vld [vmem:[#allocation5 + $0x98] sm:$0xf]
    %v137 = vld [vmem:[#allocation5 + $0x9c] sm:$0xf]
    %v138 = vld [vmem:[#allocation5 + $0xa0] sm:$0xf]
    %v139 = vld [vmem:[#allocation5 + $0xa4] sm:$0xf]
    %v140 = vld [vmem:[#allocation5 + $0xa8] sm:$0xf]
    %v141 = vld [vmem:[#allocation5 + $0xac] sm:$0xf]
    %v142 = vld [vmem:[#allocation5 + $0xb0] sm:$0xf]
    %v143 = vld [vmem:[#allocation5 + $0xb4] sm:$0xf]
    %v144 = vld [vmem:[#allocation5 + $0xb8] sm:$0xf]
    %v145 = vld [vmem:[#allocation5 + $0xbc] sm:$0xf]
    %v146 = vld [vmem:[#allocation5 + $0xc0] sm:$0xf]
    %v147 = vld [vmem:[#allocation5 + $0xc4] sm:$0xf]
    %v148 = vld [vmem:[#allocation5 + $0xc8] sm:$0xf]
    %v149 = vld [vmem:[#allocation5 + $0xcc] sm:$0xf]
    %v150 = vld [vmem:[#allocation5 + $0xd0] sm:$0xf]
    %v151 = vld [vmem:[#allocation5 + $0xd4] sm:$0xf]
    %v152 = vld [vmem:[#allocation5 + $0xd8] sm:$0xf]
    %v153 = vld [vmem:[#allocation5 + $0xdc] sm:$0xf]
    %v154 = vld [vmem:[#allocation5 + $0xe0] sm:$0xf]
    %v155 = vld [vmem:[#allocation5 + $0xe4] sm:$0xf]
    %v156 = vld [vmem:[#allocation5 + $0xe8] sm:$0xf]
    %v157 = vld [vmem:[#allocation5 + $0xec] sm:$0xf]
    %v158 = vld [vmem:[#allocation5 + $0xf0] sm:$0xf]
    %v159 = vld [vmem:[#allocation5 + $0xf4] sm:$0xf]
    %v160 = vld [vmem:[#allocation5 + $0xf8] sm:$0xf]
    %v161 = vld [vmem:[#allocation5 + $0xfc] sm:$0xf]
    %v162 = vld [vmem:[%s2] sm:$0x1]
    %v164 = vlaneseq
    %v165 = vshrl.u32 %v164, 7
    %v166 = vsub.s32 0, %v165
    %v167 = vrot.slane %v162, %v166
    %v201 = vunpack.c.l.b16 %v66
    %v202 = vunpack.c.h.b16 %v66
    %v203 = vunpack.c.l.b16 %v67
    %v204 = vunpack.c.h.b16 %v67
    %v205 = vunpack.c.l.b16 %v68
    %v206 = vunpack.c.h.b16 %v68
    %v207 = vunpack.c.l.b16 %v69
    %v208 = vunpack.c.h.b16 %v69
    %v209 = vunpack.c.l.b16 %v70
    %v210 = vunpack.c.h.b16 %v70
    %v211 = vunpack.c.l.b16 %v71
    %v212 = vunpack.c.h.b16 %v71
    %v213 = vunpack.c.l.b16 %v72
    %v214 = vunpack.c.h.b16 %v72
    %v215 = vunpack.c.l.b16 %v73
    %v216 = vunpack.c.h.b16 %v73
    %v217 = vunpack.c.l.b16 %v74
    %v218 = vunpack.c.h.b16 %v74
    %v219 = vunpack.c.l.b16 %v75
    %v220 = vunpack.c.h.b16 %v75
    %v221 = vunpack.c.l.b16 %v76
    %v222 = vunpack.c.h.b16 %v76
    %v223 = vunpack.c.l.b16 %v77
    %v224 = vunpack.c.h.b16 %v77
    %v225 = vunpack.c.l.b16 %v78
    %v226 = vunpack.c.h.b16 %v78
    %v227 = vunpack.c.l.b16 %v79
    %v228 = vunpack.c.h.b16 %v79
    %v229 = vunpack.c.l.b16 %v80
    %v230 = vunpack.c.h.b16 %v80
    %v231 = vunpack.c.l.b16 %v81
    %v232 = vunpack.c.h.b16 %v81
    %v233 = vunpack.c.l.b16 %v82
    %v234 = vunpack.c.h.b16 %v82
    %v235 = vunpack.c.l.b16 %v83
    %v236 = vunpack.c.h.b16 %v83
    %v237 = vunpack.c.l.b16 %v84
    %v238 = vunpack.c.h.b16 %v84
    %v239 = vunpack.c.l.b16 %v85
    %v240 = vunpack.c.h.b16 %v85
    %v241 = vunpack.c.l.b16 %v86
    %v242 = vunpack.c.h.b16 %v86
    %v243 = vunpack.c.l.b16 %v87
    %v244 = vunpack.c.h.b16 %v87
    %v245 = vunpack.c.l.b16 %v88
    %v246 = vunpack.c.h.b16 %v88
    %v247 = vunpack.c.l.b16 %v89
    %v248 = vunpack.c.h.b16 %v89
    %v249 = vunpack.c.l.b16 %v90
    %v250 = vunpack.c.h.b16 %v90
    %v251 = vunpack.c.l.b16 %v91
    %v252 = vunpack.c.h.b16 %v91
    %v253 = vunpack.c.l.b16 %v92
    %v254 = vunpack.c.h.b16 %v92
    %v255 = vunpack.c.l.b16 %v93
    %v256 = vunpack.c.h.b16 %v93
    %v257 = vunpack.c.l.b16 %v94
    %v258 = vunpack.c.h.b16 %v94
    %v259 = vunpack.c.l.b16 %v95
    %v260 = vunpack.c.h.b16 %v95
    %v261 = vunpack.c.l.b16 %v96
    %v262 = vunpack.c.h.b16 %v96
    %v263 = vunpack.c.l.b16 %v97
    %v264 = vunpack.c.h.b16 %v97
    %v265 = vpack.c.b16 %v205, %v201
    %v266 = vpack.c.b16 %v206, %v202
    %v267 = vpack.c.b16 %v207, %v203
    %v268 = vpack.c.b16 %v208, %v204
    %v269 = vpack.c.b16 %v213, %v209
    %v270 = vpack.c.b16 %v214, %v210
    %v271 = vpack.c.b16 %v215, %v211
    %v272 = vpack.c.b16 %v216, %v212
    %v273 = vpack.c.b16 %v221, %v217
    %v274 = vpack.c.b16 %v222, %v218
    %v275 = vpack.c.b16 %v223, %v219
    %v276 = vpack.c.b16 %v224, %v220
    %v277 = vpack.c.b16 %v229, %v225
    %v278 = vpack.c.b16 %v230, %v226
    %v279 = vpack.c.b16 %v231, %v227
    %v280 = vpack.c.b16 %v232, %v228
    %v281 = vpack.c.b16 %v237, %v233
    %v282 = vpack.c.b16 %v238, %v234
    %v283 = vpack.c.b16 %v239, %v235
    %v284 = vpack.c.b16 %v240, %v236
    %v285 = vpack.c.b16 %v245, %v241
    %v286 = vpack.c.b16 %v246, %v242
    %v287 = vpack.c.b16 %v247, %v243
    %v288 = vpack.c.b16 %v248, %v244
    %v289 = vpack.c.b16 %v253, %v249
    %v290 = vpack.c.b16 %v254, %v250
    %v291 = vpack.c.b16 %v255, %v251
    %v292 = vpack.c.b16 %v256, %v252
    %v293 = vpack.c.b16 %v261, %v257
    %v294 = vpack.c.b16 %v262, %v258
    %v295 = vpack.c.b16 %v263, %v259
    %v296 = vpack.c.b16 %v264, %v260
    %v393 = vunpack.c.l.b16 %v98
    %v394 = vunpack.c.l.b16 %v99
    %v395 = vunpack.c.l.b16 %v100
    %v396 = vunpack.c.l.b16 %v101
    %v397 = vunpack.c.l.b16 %v102
    %v398 = vunpack.c.l.b16 %v103
    %v399 = vunpack.c.l.b16 %v104
    %v400 = vunpack.c.l.b16 %v105
    %v401 = vunpack.c.l.b16 %v106
    %v402 = vunpack.c.l.b16 %v107
    %v403 = vunpack.c.l.b16 %v108
    %v404 = vunpack.c.l.b16 %v109
    %v405 = vunpack.c.l.b16 %v110
    %v406 = vunpack.c.l.b16 %v111
    %v407 = vunpack.c.l.b16 %v112
    %v408 = vunpack.c.l.b16 %v113
    %v409 = vunpack.c.l.b16 %v114
    %v410 = vunpack.c.l.b16 %v115
    %v411 = vunpack.c.l.b16 %v116
    %v412 = vunpack.c.l.b16 %v117
    %v413 = vunpack.c.l.b16 %v118
    %v414 = vunpack.c.l.b16 %v119
    %v415 = vunpack.c.l.b16 %v120
    %v416 = vunpack.c.l.b16 %v121
    %v417 = vunpack.c.l.b16 %v122
    %v418 = vunpack.c.l.b16 %v123
    %v419 = vunpack.c.l.b16 %v124
    %v420 = vunpack.c.l.b16 %v125
    %v421 = vunpack.c.l.b16 %v126
    %v422 = vunpack.c.l.b16 %v127
    %v423 = vunpack.c.l.b16 %v128
    %v424 = vunpack.c.l.b16 %v129
    %v425 = vunpack.c.l.b16 %v130
    %v426 = vunpack.c.l.b16 %v131
    %v427 = vunpack.c.l.b16 %v132
    %v428 = vunpack.c.l.b16 %v133
    %v429 = vunpack.c.l.b16 %v134
    %v430 = vunpack.c.l.b16 %v135
    %v431 = vunpack.c.l.b16 %v136
    %v432 = vunpack.c.l.b16 %v137
    %v433 = vunpack.c.l.b16 %v138
    %v434 = vunpack.c.l.b16 %v139
    %v435 = vunpack.c.l.b16 %v140
    %v436 = vunpack.c.l.b16 %v141
    %v437 = vunpack.c.l.b16 %v142
    %v438 = vunpack.c.l.b16 %v143
    %v439 = vunpack.c.l.b16 %v144
    %v440 = vunpack.c.l.b16 %v145
    %v441 = vunpack.c.l.b16 %v146
    %v442 = vunpack.c.l.b16 %v147
    %v443 = vunpack.c.l.b16 %v148
    %v444 = vunpack.c.l.b16 %v149
    %v445 = vunpack.c.l.b16 %v150
    %v446 = vunpack.c.l.b16 %v151
    %v447 = vunpack.c.l.b16 %v152
    %v448 = vunpack.c.l.b16 %v153
    %v449 = vunpack.c.l.b16 %v154
    %v450 = vunpack.c.l.b16 %v155
    %v451 = vunpack.c.l.b16 %v156
    %v452 = vunpack.c.l.b16 %v157
    %v453 = vunpack.c.l.b16 %v158
    %v454 = vunpack.c.l.b16 %v159
    %v455 = vunpack.c.l.b16 %v160
    %v456 = vunpack.c.l.b16 %v161
    %v457 = vpack.c.b16 %v394, %v393
    %v458 = vpack.c.b16 %v396, %v395
    %v459 = vpack.c.b16 %v398, %v397
    %v460 = vpack.c.b16 %v400, %v399
    %v461 = vpack.c.b16 %v402, %v401
    %v462 = vpack.c.b16 %v404, %v403
    %v463 = vpack.c.b16 %v406, %v405
    %v464 = vpack.c.b16 %v408, %v407
    %v465 = vpack.c.b16 %v410, %v409
    %v466 = vpack.c.b16 %v412, %v411
    %v467 = vpack.c.b16 %v414, %v413
    %v468 = vpack.c.b16 %v416, %v415
    %v469 = vpack.c.b16 %v418, %v417
    %v470 = vpack.c.b16 %v420, %v419
    %v471 = vpack.c.b16 %v422, %v421
    %v472 = vpack.c.b16 %v424, %v423
    %v473 = vpack.c.b16 %v426, %v425
    %v474 = vpack.c.b16 %v428, %v427
    %v475 = vpack.c.b16 %v430, %v429
    %v476 = vpack.c.b16 %v432, %v431
    %v477 = vpack.c.b16 %v434, %v433
    %v478 = vpack.c.b16 %v436, %v435
    %v479 = vpack.c.b16 %v438, %v437
    %v480 = vpack.c.b16 %v440, %v439
    %v481 = vpack.c.b16 %v442, %v441
    %v482 = vpack.c.b16 %v444, %v443
    %v483 = vpack.c.b16 %v446, %v445
    %v484 = vpack.c.b16 %v448, %v447
    %v485 = vpack.c.b16 %v450, %v449
    %v486 = vpack.c.b16 %v452, %v451
    %v487 = vpack.c.b16 %v454, %v453
    %v488 = vpack.c.b16 %v456, %v455
    %521 = vmatprep.subr.bf16.mxu0 0
    %522 = vmatpush1.bf16.msra.mxu0 %v464
    %523 = vmatprep.subr.bf16.mxu0 0
    %524 = vmatpush1.bf16.msra.mxu0 %v463
    %525 = vmatprep.subr.bf16.mxu0 0
    %526 = vmatpush1.bf16.msra.mxu0 %v462
    %527 = vmatprep.subr.bf16.mxu0 0
    %528 = vmatpush1.bf16.msra.mxu0 %v461
    %529 = vmatprep.subr.bf16.mxu0 0
    %530 = vmatpush1.bf16.msra.mxu0 %v460
    %531 = vmatprep.subr.bf16.mxu0 0
    %532 = vmatpush1.bf16.msra.mxu0 %v459
    %533 = vmatprep.subr.bf16.mxu0 0
    %534 = vmatpush1.bf16.msra.mxu0 %v458
    %535 = vmatprep.subr.bf16.mxu0 0
    %536 = vmatpush1.bf16.msra.mxu0 %v457
    %537 = vmatprep.subr.bf16.mxu0 0
    %538 = vmatpush2.bf16.msra.mxu0 %v472
    %539 = vmatprep.subr.bf16.mxu0 0
    %540 = vmatpush2.bf16.msra.mxu0 %v471
    %541 = vmatprep.subr.bf16.mxu0 0
    %542 = vmatpush2.bf16.msra.mxu0 %v470
    %543 = vmatprep.subr.bf16.mxu0 0
    %544 = vmatpush2.bf16.msra.mxu0 %v469
    %545 = vmatprep.subr.bf16.mxu0 0
    %546 = vmatpush2.bf16.msra.mxu0 %v468
    %547 = vmatprep.subr.bf16.mxu0 0
    %548 = vmatpush2.bf16.msra.mxu0 %v467
    %549 = vmatprep.subr.bf16.mxu0 0
    %550 = vmatpush2.bf16.msra.mxu0 %v466
    %551 = vmatprep.subr.bf16.mxu0 0
    %552 = vmatpush2.bf16.msra.mxu0 %v465
    %553 = vmatprep.mubr.bf16.mxu0 %v266
    %554 = vmatmul.mubr.bf16.gmra.mxu0 %v265
    %v555 = vpop.f32.mrf.mxu0
    %v556 = vadd.f32 %v167, %v555
    %v557 = vpop.f32.mrf.mxu0
    %v558 = vpop.f32.mrf.mxu0
    %v559 = vadd.f32 %v167, %v558
    %v560 = vpop.f32.mrf.mxu0
    %561 = vmatprep.mubr.bf16.mxu0 %v270
    %562 = vmatmul.mubr.bf16.gmra.mxu0 %v269
    %v563 = vpop.f32.mrf.mxu0
    %v564 = vadd.f32 %v167, %v563
    %v565 = vpop.f32.mrf.mxu0
    %v566 = vpop.f32.mrf.mxu0
    %v567 = vadd.f32 %v167, %v566
    %v568 = vpop.f32.mrf.mxu0
    %569 = vmatprep.mubr.bf16.mxu0 %v274
    %570 = vmatmul.mubr.bf16.gmra.mxu0 %v273
    %v571 = vpop.f32.mrf.mxu0
    %v572 = vadd.f32 %v167, %v571
    %v573 = vpop.f32.mrf.mxu0
    %v574 = vpop.f32.mrf.mxu0
    %v575 = vadd.f32 %v167, %v574
    %v576 = vpop.f32.mrf.mxu0
    %577 = vmatprep.mubr.bf16.mxu0 %v278
    %578 = vmatmul.mubr.bf16.gmra.mxu0 %v277
    %v579 = vpop.f32.mrf.mxu0
    %v580 = vadd.f32 %v167, %v579
    %v581 = vpop.f32.mrf.mxu0
    %v582 = vpop.f32.mrf.mxu0
    %v583 = vadd.f32 %v167, %v582
    %v584 = vpop.f32.mrf.mxu0
    %585 = vmatprep.mubr.bf16.mxu0 %v282
    %586 = vmatmul.mubr.bf16.gmra.mxu0 %v281
    %v587 = vpop.f32.mrf.mxu0
    %v588 = vadd.f32 %v167, %v587
    %v589 = vpop.f32.mrf.mxu0
    %v590 = vpop.f32.mrf.mxu0
    %v591 = vadd.f32 %v167, %v590
    %v592 = vpop.f32.mrf.mxu0
    %593 = vmatprep.mubr.bf16.mxu0 %v286
    %594 = vmatmul.mubr.bf16.gmra.mxu0 %v285
    %v595 = vpop.f32.mrf.mxu0
    %v596 = vadd.f32 %v167, %v595
    %v597 = vpop.f32.mrf.mxu0
    %v598 = vpop.f32.mrf.mxu0
    %v599 = vadd.f32 %v167, %v598
    %v600 = vpop.f32.mrf.mxu0
    %601 = vmatprep.mubr.bf16.mxu0 %v290
    %602 = vmatmul.mubr.bf16.gmra.mxu0 %v289
    %v603 = vpop.f32.mrf.mxu0
    %v604 = vadd.f32 %v167, %v603
    %v605 = vpop.f32.mrf.mxu0
    %v606 = vpop.f32.mrf.mxu0
    %v607 = vadd.f32 %v167, %v606
    %v608 = vpop.f32.mrf.mxu0
    %609 = vmatprep.mubr.bf16.mxu0 %v294
    %610 = vmatmul.mubr.bf16.gmra.mxu0 %v293
    %v611 = vpop.f32.mrf.mxu0
    %v612 = vadd.f32 %v167, %v611
    %v613 = vpop.f32.mrf.mxu0
    %v614 = vpop.f32.mrf.mxu0
    %v615 = vadd.f32 %v167, %v614
    %v616 = vpop.f32.mrf.mxu0
    %617 = vdwg.mxu0
    %618 = vmatprep.subr.bf16.mxu0 0
    %619 = vmatpush1.bf16.msra.mxu0 %v480
    %620 = vmatprep.subr.bf16.mxu0 0
    %621 = vmatpush1.bf16.msra.mxu0 %v479
    %622 = vmatprep.subr.bf16.mxu0 0
    %623 = vmatpush1.bf16.msra.mxu0 %v478
    %624 = vmatprep.subr.bf16.mxu0 0
    %625 = vmatpush1.bf16.msra.mxu0 %v477
    %626 = vmatprep.subr.bf16.mxu0 0
    %627 = vmatpush1.bf16.msra.mxu0 %v476
    %628 = vmatprep.subr.bf16.mxu0 0
    %629 = vmatpush1.bf16.msra.mxu0 %v475
    %630 = vmatprep.subr.bf16.mxu0 0
    %631 = vmatpush1.bf16.msra.mxu0 %v474
    %632 = vmatprep.subr.bf16.mxu0 0
    %633 = vmatpush1.bf16.msra.mxu0 %v473
    %634 = vmatprep.subr.bf16.mxu0 0
    %635 = vmatpush2.bf16.msra.mxu0 %v488
    %636 = vmatprep.subr.bf16.mxu0 0
    %637 = vmatpush2.bf16.msra.mxu0 %v487
    %638 = vmatprep.subr.bf16.mxu0 0
    %639 = vmatpush2.bf16.msra.mxu0 %v486
    %640 = vmatprep.subr.bf16.mxu0 0
    %641 = vmatpush2.bf16.msra.mxu0 %v485
    %642 = vmatprep.subr.bf16.mxu0 0
    %643 = vmatpush2.bf16.msra.mxu0 %v484
    %644 = vmatprep.subr.bf16.mxu0 0
    %645 = vmatpush2.bf16.msra.mxu0 %v483
    %646 = vmatprep.subr.bf16.mxu0 0
    %647 = vmatpush2.bf16.msra.mxu0 %v482
    %648 = vmatprep.subr.bf16.mxu0 0
    %649 = vmatpush2.bf16.msra.mxu0 %v481
    %650 = vmatprep.mubr.bf16.mxu0 %v268
    %651 = vmatmul.mubr.bf16.gmra.mxu0 %v267
    %v652 = vpop.f32.mrf.mxu0
    %v653 = vadd.f32 %v556, %v652
    %v654 = vpop.f32.mrf.mxu0
    %v655 = vpop.f32.mrf.mxu0
    %v656 = vadd.f32 %v559, %v655
    %v657 = vpop.f32.mrf.mxu0
    %658 = vmatprep.mubr.bf16.mxu0 %v272
    %659 = vmatmul.mubr.bf16.gmra.mxu0 %v271
    %v660 = vpop.f32.mrf.mxu0
    %v661 = vadd.f32 %v564, %v660
    %v662 = vpop.f32.mrf.mxu0
    %v663 = vpop.f32.mrf.mxu0
    %v664 = vadd.f32 %v567, %v663
    %v665 = vpop.f32.mrf.mxu0
    %666 = vmatprep.mubr.bf16.mxu0 %v276
    %667 = vmatmul.mubr.bf16.gmra.mxu0 %v275
    %v668 = vpop.f32.mrf.mxu0
    %v669 = vadd.f32 %v572, %v668
    %v670 = vpop.f32.mrf.mxu0
    %v671 = vpop.f32.mrf.mxu0
    %v672 = vadd.f32 %v575, %v671
    %v673 = vpop.f32.mrf.mxu0
    %674 = vmatprep.mubr.bf16.mxu0 %v280
    %675 = vmatmul.mubr.bf16.gmra.mxu0 %v279
    %v676 = vpop.f32.mrf.mxu0
    %v677 = vadd.f32 %v580, %v676
    %v678 = vpop.f32.mrf.mxu0
    %v679 = vpop.f32.mrf.mxu0
    %v680 = vadd.f32 %v583, %v679
    %v681 = vpop.f32.mrf.mxu0
    %682 = vmatprep.mubr.bf16.mxu0 %v284
    %683 = vmatmul.mubr.bf16.gmra.mxu0 %v283
    %v684 = vpop.f32.mrf.mxu0
    %v685 = vadd.f32 %v588, %v684
    %v686 = vpop.f32.mrf.mxu0
    %v687 = vpop.f32.mrf.mxu0
    %v688 = vadd.f32 %v591, %v687
    %v689 = vpop.f32.mrf.mxu0
    %690 = vmatprep.mubr.bf16.mxu0 %v288
    %691 = vmatmul.mubr.bf16.gmra.mxu0 %v287
    %v692 = vpop.f32.mrf.mxu0
    %v693 = vadd.f32 %v596, %v692
    %v694 = vpop.f32.mrf.mxu0
    %v695 = vpop.f32.mrf.mxu0
    %v696 = vadd.f32 %v599, %v695
    %v697 = vpop.f32.mrf.mxu0
    %698 = vmatprep.mubr.bf16.mxu0 %v292
    %699 = vmatmul.mubr.bf16.gmra.mxu0 %v291
    %v700 = vpop.f32.mrf.mxu0
    %v701 = vadd.f32 %v604, %v700
    %v702 = vpop.f32.mrf.mxu0
    %v703 = vpop.f32.mrf.mxu0
    %v704 = vadd.f32 %v607, %v703
    %v705 = vpop.f32.mrf.mxu0
    %706 = vmatprep.mubr.bf16.mxu0 %v296
    %707 = vmatmul.mubr.bf16.gmra.mxu0 %v295
    %v708 = vpop.f32.mrf.mxu0
    %v709 = vadd.f32 %v612, %v708
    %v710 = vpop.f32.mrf.mxu0
    %v711 = vpop.f32.mrf.mxu0
    %v712 = vadd.f32 %v615, %v711
    %v713 = vpop.f32.mrf.mxu0
    %714 = vdwg.mxu0
    %v715 = vld [vmem:[#allocation7] sm:$0xff]
    %v716 = vld [vmem:[#allocation7 + $0x8] sm:$0xff]
    %v717 = vld [vmem:[#allocation7 + $0x10] sm:$0xff]
    %v718 = vld [vmem:[#allocation7 + $0x18] sm:$0xff]
    %v719 = vld [vmem:[#allocation7 + $0x20] sm:$0xff]
    %v720 = vld [vmem:[#allocation7 + $0x28] sm:$0xff]
    %v721 = vld [vmem:[#allocation7 + $0x30] sm:$0xff]
    %v722 = vld [vmem:[#allocation7 + $0x38] sm:$0xff]
    %v723 = vld [vmem:[#allocation7 + $0x40] sm:$0xff]
    %v724 = vld [vmem:[#allocation7 + $0x48] sm:$0xff]
    %v725 = vld [vmem:[#allocation7 + $0x50] sm:$0xff]
    %v726 = vld [vmem:[#allocation7 + $0x58] sm:$0xff]
    %v727 = vld [vmem:[#allocation7 + $0x60] sm:$0xff]
    %v728 = vld [vmem:[#allocation7 + $0x68] sm:$0xff]
    %v729 = vld [vmem:[#allocation7 + $0x70] sm:$0xff]
    %v730 = vld [vmem:[#allocation7 + $0x78] sm:$0xff]
    %v731 = vadd.f32 %v653, %v715
    %v732 = vadd.f32 %v656, %v716
    %v733 = vadd.f32 %v661, %v717
    %v734 = vadd.f32 %v664, %v718
    %v735 = vadd.f32 %v669, %v719
    %v736 = vadd.f32 %v672, %v720
    %v737 = vadd.f32 %v677, %v721
    %v738 = vadd.f32 %v680, %v722
    %v739 = vadd.f32 %v685, %v723
    %v740 = vadd.f32 %v688, %v724
    %v741 = vadd.f32 %v693, %v725
    %v742 = vadd.f32 %v696, %v726
    %v743 = vadd.f32 %v701, %v727
    %v744 = vadd.f32 %v704, %v728
    %v745 = vadd.f32 %v709, %v729
    %v746 = vadd.f32 %v712, %v730
    %747 = vadd.xlane.f32.xlu0 %v731
    %v748 = vpop.xlane.xlu0 %747
    %749 = vadd.xlane.f32.xlu0 %v732
    %v750 = vpop.xlane.xlu0 %749
    %751 = vadd.xlane.f32.xlu0 %v733
    %v752 = vpop.xlane.xlu0 %751
    %753 = vadd.xlane.f32.xlu0 %v734
    %v754 = vpop.xlane.xlu0 %753
    %755 = vadd.xlane.f32.xlu0 %v735
    %v756 = vpop.xlane.xlu0 %755
    %757 = vadd.xlane.f32.xlu0 %v736
    %v758 = vpop.xlane.xlu0 %757
    %759 = vadd.xlane.f32.xlu0 %v737
    %v760 = vpop.xlane.xlu0 %759
    %761 = vadd.xlane.f32.xlu0 %v738
    %v762 = vpop.xlane.xlu0 %761
    %763 = vadd.xlane.f32.xlu0 %v739
    %v764 = vpop.xlane.xlu0 %763
    %765 = vadd.xlane.f32.xlu0 %v740
    %v766 = vpop.xlane.xlu0 %765
    %767 = vadd.xlane.f32.xlu0 %v741
    %v768 = vpop.xlane.xlu0 %767
    %769 = vadd.xlane.f32.xlu0 %v742
    %v770 = vpop.xlane.xlu0 %769
    %771 = vadd.xlane.f32.xlu0 %v743
    %v772 = vpop.xlane.xlu0 %771
    %773 = vadd.xlane.f32.xlu0 %v744
    %v774 = vpop.xlane.xlu0 %773
    %775 = vadd.xlane.f32.xlu0 %v745
    %v776 = vpop.xlane.xlu0 %775
    %777 = vadd.xlane.f32.xlu0 %v746
    %v778 = vpop.xlane.xlu0 %777
    %v779 = vmul.f32 %v748, 0.0078125
    %v780 = vmul.f32 %v750, 0.0078125
    %v781 = vmul.f32 %v752, 0.0078125
    %v782 = vmul.f32 %v754, 0.0078125
    %v783 = vmul.f32 %v756, 0.0078125
    %v784 = vmul.f32 %v758, 0.0078125
    %v785 = vmul.f32 %v760, 0.0078125
    %v786 = vmul.f32 %v762, 0.0078125
    %v787 = vmul.f32 %v764, 0.0078125
    %v788 = vmul.f32 %v766, 0.0078125
    %v789 = vmul.f32 %v768, 0.0078125
    %v790 = vmul.f32 %v770, 0.0078125
    %v791 = vmul.f32 %v772, 0.0078125
    %v792 = vmul.f32 %v774, 0.0078125
    %v793 = vmul.f32 %v776, 0.0078125
    %v794 = vmul.f32 %v778, 0.0078125
    %v795 = vsub.f32 %v731, %v779
    %v796 = vsub.f32 %v732, %v780
    %v797 = vsub.f32 %v733, %v781
    %v798 = vsub.f32 %v734, %v782
    %v799 = vsub.f32 %v735, %v783
    %v800 = vsub.f32 %v736, %v784
    %v801 = vsub.f32 %v737, %v785
    %v802 = vsub.f32 %v738, %v786
    %v803 = vsub.f32 %v739, %v787
    %v804 = vsub.f32 %v740, %v788
    %v805 = vsub.f32 %v741, %v789
    %v806 = vsub.f32 %v742, %v790
    %v807 = vsub.f32 %v743, %v791
    %v808 = vsub.f32 %v744, %v792
    %v809 = vsub.f32 %v745, %v793
    %v810 = vsub.f32 %v746, %v794
    %v811 = vmul.f32 %v795, %v795
    %v812 = vmul.f32 %v796, %v796
    %v813 = vmul.f32 %v797, %v797
    %v814 = vmul.f32 %v798, %v798
    %v815 = vmul.f32 %v799, %v799
    %v816 = vmul.f32 %v800, %v800
    %v817 = vmul.f32 %v801, %v801
    %v818 = vmul.f32 %v802, %v802
    %v819 = vmul.f32 %v803, %v803
    %v820 = vmul.f32 %v804, %v804
    %v821 = vmul.f32 %v805, %v805
    %v822 = vmul.f32 %v806, %v806
    %v823 = vmul.f32 %v807, %v807
    %v824 = vmul.f32 %v808, %v808
    %v825 = vmul.f32 %v809, %v809
    %v826 = vmul.f32 %v810, %v810
    %827 = vadd.xlane.f32.xlu0 %v811
    %v828 = vpop.xlane.xlu0 %827
    %829 = vadd.xlane.f32.xlu0 %v812
    %v830 = vpop.xlane.xlu0 %829
    %831 = vadd.xlane.f32.xlu0 %v813
    %v832 = vpop.xlane.xlu0 %831
    %833 = vadd.xlane.f32.xlu0 %v814
    %v834 = vpop.xlane.xlu0 %833
    %835 = vadd.xlane.f32.xlu0 %v815
    %v836 = vpop.xlane.xlu0 %835
    %837 = vadd.xlane.f32.xlu0 %v816
    %v838 = vpop.xlane.xlu0 %837
    %839 = vadd.xlane.f32.xlu0 %v817
    %v840 = vpop.xlane.xlu0 %839
    %841 = vadd.xlane.f32.xlu0 %v818
    %v842 = vpop.xlane.xlu0 %841
    %843 = vadd.xlane.f32.xlu0 %v819
    %v844 = vpop.xlane.xlu0 %843
    %845 = vadd.xlane.f32.xlu0 %v820
    %v846 = vpop.xlane.xlu0 %845
    %847 = vadd.xlane.f32.xlu0 %v821
    %v848 = vpop.xlane.xlu0 %847
    %849 = vadd.xlane.f32.xlu0 %v822
    %v850 = vpop.xlane.xlu0 %849
    %851 = vadd.xlane.f32.xlu0 %v823
    %v852 = vpop.xlane.xlu0 %851
    %853 = vadd.xlane.f32.xlu0 %v824
    %v854 = vpop.xlane.xlu0 %853
    %855 = vadd.xlane.f32.xlu0 %v825
    %v856 = vpop.xlane.xlu0 %855
    %857 = vadd.xlane.f32.xlu0 %v826
    %v858 = vpop.xlane.xlu0 %857
    %v859 = vmul.f32 %v828, 0.0078125
    %v860 = vmul.f32 %v830, 0.0078125
    %v861 = vmul.f32 %v832, 0.0078125
    %v862 = vmul.f32 %v834, 0.0078125
    %v863 = vmul.f32 %v836, 0.0078125
    %v864 = vmul.f32 %v838, 0.0078125
    %v865 = vmul.f32 %v840, 0.0078125
    %v866 = vmul.f32 %v842, 0.0078125
    %v867 = vmul.f32 %v844, 0.0078125
    %v868 = vmul.f32 %v846, 0.0078125
    %v869 = vmul.f32 %v848, 0.0078125
    %v870 = vmul.f32 %v850, 0.0078125
    %v871 = vmul.f32 %v852, 0.0078125
    %v872 = vmul.f32 %v854, 0.0078125
    %v873 = vmul.f32 %v856, 0.0078125
    %v874 = vmul.f32 %v858, 0.0078125
    %v875 = vadd.f32 %v859, 1e-12
    %v876 = vadd.f32 %v860, 1e-12
    %v877 = vadd.f32 %v861, 1e-12
    %v878 = vadd.f32 %v862, 1e-12
    %v879 = vadd.f32 %v863, 1e-12
    %v880 = vadd.f32 %v864, 1e-12
    %v881 = vadd.f32 %v865, 1e-12
    %v882 = vadd.f32 %v866, 1e-12
    %v883 = vadd.f32 %v867, 1e-12
    %v884 = vadd.f32 %v868, 1e-12
    %v885 = vadd.f32 %v869, 1e-12
    %v886 = vadd.f32 %v870, 1e-12
    %v887 = vadd.f32 %v871, 1e-12
    %v888 = vadd.f32 %v872, 1e-12
    %v889 = vadd.f32 %v873, 1e-12
    %v890 = vadd.f32 %v874, 1e-12
    %v891 = vrsqrt.pop %v875
    %v892 = vrsqrt.pop %v876
    %v893 = vrsqrt.pop %v877
    %v894 = vrsqrt.pop %v878
    %v895 = vrsqrt.pop %v879
    %v896 = vrsqrt.pop %v880
    %v897 = vrsqrt.pop %v881
    %v898 = vrsqrt.pop %v882
    %v899 = vrsqrt.pop %v883
    %v900 = vrsqrt.pop %v884
    %v901 = vrsqrt.pop %v885
    %v902 = vrsqrt.pop %v886
    %v903 = vrsqrt.pop %v887
    %v904 = vrsqrt.pop %v888
    %v905 = vrsqrt.pop %v889
    %v906 = vrsqrt.pop %v890
    %v907 = vmul.f32 %v795, %v891
    %v908 = vmul.f32 %v796, %v892
    %v909 = vmul.f32 %v797, %v893
    %v910 = vmul.f32 %v798, %v894
    %v911 = vmul.f32 %v799, %v895
    %v912 = vmul.f32 %v800, %v896
    %v913 = vmul.f32 %v801, %v897
    %v914 = vmul.f32 %v802, %v898
    %v915 = vmul.f32 %v803, %v899
    %v916 = vmul.f32 %v804, %v900
    %v917 = vmul.f32 %v805, %v901
    %v918 = vmul.f32 %v806, %v902
    %v919 = vmul.f32 %v807, %v903
    %v920 = vmul.f32 %v808, %v904
    %v921 = vmul.f32 %v809, %v905
    %v922 = vmul.f32 %v810, %v906
    %v923 = vld [vmem:[%s4] sm:$0x1]
    %v925 = vlaneseq
    %v926 = vshrl.u32 %v925, 7
    %v927 = vsub.s32 0, %v926
    %v928 = vrot.slane %v923, %v927
    %v930 = vmul.f32 %v907, %v928
    %v931 = vmul.f32 %v908, %v928
    %v932 = vmul.f32 %v909, %v928
    %v933 = vmul.f32 %v910, %v928
    %v934 = vmul.f32 %v911, %v928
    %v935 = vmul.f32 %v912, %v928
    %v936 = vmul.f32 %v913, %v928
    %v937 = vmul.f32 %v914, %v928
    %v938 = vmul.f32 %v915, %v928
    %v939 = vmul.f32 %v916, %v928
    %v940 = vmul.f32 %v917, %v928
    %v941 = vmul.f32 %v918, %v928
    %v942 = vmul.f32 %v919, %v928
    %v943 = vmul.f32 %v920, %v928
    %v944 = vmul.f32 %v921, %v928
    %v945 = vmul.f32 %v922, %v928
    %v946 = vld [vmem:[%s5] sm:$0x1]
    %v948 = vlaneseq
    %v949 = vshrl.u32 %v948, 7
    %v950 = vsub.s32 0, %v949
    %v951 = vrot.slane %v946, %v950
    %v953 = vadd.f32 %v930, %v951
    %v954 = vadd.f32 %v931, %v951
    %v955 = vadd.f32 %v932, %v951
    %v956 = vadd.f32 %v933, %v951
    %v957 = vadd.f32 %v934, %v951
    %v958 = vadd.f32 %v935, %v951
    %v959 = vadd.f32 %v936, %v951
    %v960 = vadd.f32 %v937, %v951
    %v961 = vadd.f32 %v938, %v951
    %v962 = vadd.f32 %v939, %v951
    %v963 = vadd.f32 %v940, %v951
    %v964 = vadd.f32 %v941, %v951
    %v965 = vadd.f32 %v942, %v951
    %v966 = vadd.f32 %v943, %v951
    %v967 = vadd.f32 %v944, %v951
    %v968 = vadd.f32 %v945, %v951
    %969 = vst [vmem:[#allocation8] sm:$0xff] %v953
    %970 = vst [vmem:[#allocation8 + $0x8] sm:$0xff] %v954
    %971 = vst [vmem:[#allocation8 + $0x10] sm:$0xff] %v955
    %972 = vst [vmem:[#allocation8 + $0x18] sm:$0xff] %v956
    %973 = vst [vmem:[#allocation8 + $0x20] sm:$0xff] %v957
    %974 = vst [vmem:[#allocation8 + $0x28] sm:$0xff] %v958
    %975 = vst [vmem:[#allocation8 + $0x30] sm:$0xff] %v959
    %976 = vst [vmem:[#allocation8 + $0x38] sm:$0xff] %v960
    %977 = vst [vmem:[#allocation8 + $0x40] sm:$0xff] %v961
    %978 = vst [vmem:[#allocation8 + $0x48] sm:$0xff] %v962
    %979 = vst [vmem:[#allocation8 + $0x50] sm:$0xff] %v963
    %980 = vst [vmem:[#allocation8 + $0x58] sm:$0xff] %v964
    %981 = vst [vmem:[#allocation8 + $0x60] sm:$0xff] %v965
    %982 = vst [vmem:[#allocation8 + $0x68] sm:$0xff] %v966
    %983 = vst [vmem:[#allocation8 + $0x70] sm:$0xff] %v967
    %984 = vst [vmem:[#allocation8 + $0x78] sm:$0xff] %v968
    // Predicated region
    $region38: #{tpu_custom_call.1} parent=1 // pred_check
      _
    $region39: #{tpu_custom_call.1} parent=1 // pred_check_branch
      %986 = sbr.rel (0) target = $region41
    $region40: #{tpu_custom_call.1} parent=1 // pred_region
      %s988 = ssub.s32 2048, 2048
      %989 = vsyncadd [#allocation4], %s988
      %s990 = sshll.u32 [#allocation8], 4
      %s991 = int_to_ptr.vmem [resolvable:$true] %s990
      %996 = dma.vmem_to_hbm [thread:$0]  %s991, 2048, %s6, [#allocation4], 128, 128, 8
    $region41: #{tpu_custom_call.1} parent=1 // pred_fallthru
      _
    // Predicated region
    $region42: #{tpu_custom_call.1} parent=1 // pred_check
      _
    $region43: #{tpu_custom_call.1} parent=1 // pred_check_branch
      %998 = sbr.rel (0) target = $region45
    $region44: #{tpu_custom_call.1} parent=1 // pred_region
      %999 = dma.done [#allocation4], 2048
    $region45: #{tpu_custom_call.1} parent=1 // pred_fallthru
      _
    %1000 = vsyncpa [#allocation3], 1
    %1001 = vsyncpa [#allocation6], 1
    %1002 = vsyncpa [#allocation4], 1

</llo_original>
